<compile_context>
chip_gen: v7x
topology: tpu7x:2x2x1
jax: 0.10.0
libtpu: 0.0.40
codegen_flags: <defaults>
</compile_context>

<pallas_src>
import functools

import jax
import jax.numpy as jnp
import numpy as np
from jax import lax
from jax.experimental import pallas as pl
from jax.experimental.pallas import tpu as pltpu

_MB = 1024 * 1024


def _round_up(a, b):
    return ((a + b - 1) // b) * b


def _vmem_capacity_bytes():
    """Best-effort per-core VMEM capacity (v4/v5/v6: 128 MiB, v7x: 64 MiB)."""
    try:
        cap = getattr(pltpu.get_tpu_info(), "vmem_capacity_bytes", None)
        if cap:
            return int(cap)
    except Exception:
        pass
    try:
        kind = jax.devices()[0].device_kind.lower()
        if any(t in kind for t in ("v4", "v5", "v6")):
            return 128 * _MB
    except Exception:
        pass
    return 64 * _MB  # safe floor (v7x per-core VMEM)


# ----------------------------- Pallas kernels ------------------------------ #


def _conv3d_s2_kernel(x0_ref, x1_ref, x2_ref, w_ref, b_ref, o_ref, *, OH, OWp, C):
    """Conv3d(kernel=3, stride=2, padding=1); all 27 taps fused into one grid step.

      x{0,1,2}_ref : (Hh, 2, Wh, 2C)  padded-depth slices 2*od+{0,1,2};
                     H/W split as (half, parity); lane dim packs [w-parity, C].
      w_ref        : (9, 3C, TCo)     axis0 = kd*3+kh, axis1 = [kw0|kw1|kw2] x Cin.
      b_ref        : (1, TCo)         float32 bias.
      o_ref        : (OH*OWp, TCo)    written exactly once per step.
    """
    M = OH * OWp
    acc = None
    for kd, xr in enumerate((x0_ref, x1_ref, x2_ref)):
        for kh in range(3):
            hh, hp = kh // 2, kh % 2
            # kw=0 and kw=1 taps are lane-contiguous -> one K=2C MXU dot.
            tap01 = xr[hh:hh + OH, hp, 0:OWp, :].reshape(M, 2 * C)
            part = jnp.dot(tap01, w_ref[kd * 3 + kh, :2 * C, :],
                           preferred_element_type=jnp.float32)
            # kw=2 tap: parity-0 channels of the next width half -> K=C dot.
            tap2 = xr[hh:hh + OH, hp, 1:OWp + 1, 0:C].reshape(M, C)
            part = part + jnp.dot(tap2, w_ref[kd * 3 + kh, 2 * C:, :],
                                  preferred_element_type=jnp.float32)
            acc = part if acc is None else acc + part
    o_ref[...] = (acc + b_ref[...]).astype(o_ref.dtype)


def _avgpool2_kernel(x_ref, o_ref, *, C):
    """AvgPool3d(kernel=2, stride=2): three pairwise adds in VMEM.

      x_ref: (TB, 2, TOH, 2, OW, 2C)  (slice batch, d-pair, oh, h-pair, ow, [w-parity, C])
      o_ref: (TB, TOH, OW, C)
    """
    v = x_ref[...].astype(jnp.float32)
    a = v[:, 0] + v[:, 1]              # depth pair
    b = a[:, :, 0] + a[:, :, 1]        # height pair
    c = b[..., :C] + b[..., C:]        # width pair (parity-major halves of the lane dim)
    o_ref[...] = (c * 0.125).astype(o_ref.dtype)


# ------------------------------- wrappers ----------------------------------- #


def _pick_tco(Co, est, budget):
    """Largest lane-aligned output-channel tile that fits the VMEM budget."""
    if est(Co) <= budget:
        return Co
    best = 128
    t = (Co // 128) * 128
    while t >= 128:
        if est(t) <= budget:
            best = t
            break
        t -= 128
    # Prefer 256-aligned tiles (v6e/v7x MXU passes are 256 wide) when that does
    # not increase the number of co sweeps.
    if best > 256 and best % 256 != 0:
        alt = (best // 256) * 256
        if -(-Co // alt) == -(-Co // best):
            best = alt
    # TODO(synk): if even TCo=128 exceeds the budget (huge C*H*W on v7x) a
    # K-tiled / halo-tiled variant with weight re-streaming would be needed.
    return best


@functools.partial(jax.jit, static_argnames=("compute_dtype",))
def _conv_downsample(x, weight, bias, *, compute_dtype=jnp.float32):
    """Conv3d(C -> Co, kernel=3, stride=2, padding=1) on NCDHW input."""
    N, C, D, H, W = x.shape
    Co = weight.shape[0]
    OD = (D - 1) // 2 + 1
    OH = (H - 1) // 2 + 1
    OW = (W - 1) // 2 + 1

    itemsize = jnp.dtype(compute_dtype).itemsize
    out_isz = jnp.dtype(x.dtype).itemsize
    sub = 8 * (4 // itemsize)                 # sublane multiple: 8 (f32) / 16 (bf16)
    OWp = _round_up(OW, sub)                  # pad OW -> aligned (OH,OWp)->(M,) reshape
    Hh, Wh = OH + 1, OWp + 1

    # Channels-last + zero padding (padding=1, then right-pad so the padded
    # extents are exactly 2*Hh / 2*Wh).  Everything below this is a free reshape.
    # TODO(synk): these NCDHW<->channels-last transposes are full-volume HBM
    # passes; keeping activations channels-last across the model removes them.
    xcl = jnp.transpose(x, (0, 2, 3, 4, 1)).astype(compute_dtype)
    xp = jnp.pad(xcl, ((0, 0), (1, 1),
                       (1, 2 * Hh - H - 1), (1, 2 * Wh - W - 1), (0, 0)))
    xr = xp.reshape(N * (D + 2), Hh, 2, Wh, 2 * C)

    # torch (Co, Cin, kD, kH, kW) -> (kd*3+kh, [kw0|kw1|kw2] x Cin, Co)
    w_col = jnp.transpose(weight, (2, 3, 4, 1, 0)).reshape(9, 3 * C, Co)
    w_col = w_col.astype(compute_dtype)
    b_col = bias.reshape(1, Co).astype(jnp.float32)

    # ---- VMEM-aware output-channel tile --------------------------------------
    cap = _vmem_capacity_bytes()
    budget = int(0.6 * cap)
    x_blk = Hh * 2 * Wh * 2 * C * itemsize

    def _est(tco):
        return (3 * 2 * x_blk                       # 3 depth-tap inputs, 2 buffers each
                + 2 * 27 * C * tco * itemsize       # resident weight, 2 buffers
                + 2 * OH * OWp * tco * out_isz      # output block, 2 buffers
                + 2 * OH * OWp * tco * 4            # f32 accumulation temporaries
                + 2 * tco * 4)                      # bias

    TCo = _pick_tco(Co, _est, budget)
    Cop = _round_up(Co, TCo)
    n_co = Cop // TCo
    if Cop != Co:
        w_col = jnp.pad(w_col, ((0, 0), (0, 0), (0, Cop - Co)))
        b_col = jnp.pad(b_col, ((0, 0), (0, Cop - Co)))
    # TODO(synk): no OH/OW halo tiling yet -- one padded (Hh,2,Wh,2C) slab must
    # fit VMEM; very large H*W*C on v7x needs pl.Element / manual-DMA halo tiles.

    # ---- grid ordering: stream activations once (co innermost, weight restream)
    # vs stream the volume once per co tile (co outermost, resident weight),
    # whichever moves fewer HBM bytes.
    act_bytes = xr.size * itemsize
    w_bytes = 27 * C * Cop * itemsize
    j_inner = (n_co == 1) or (act_bytes + N * OD * w_bytes
                              <= n_co * act_bytes + w_bytes)

    xblk = (None, Hh, 2, Wh, 2 * C)
    wblk = (9, 3 * C, TCo)
    bblk = (1, TCo)
    oblk = (None, OH * OWp, TCo)
    if j_inner:
        grid = (N, OD, n_co)
        x_specs = [pl.BlockSpec(xblk, (lambda n, od, j, _k=k:
                                       (n * (D + 2) + 2 * od + _k, 0, 0, 0, 0)))
                   for k in range(3)]
        w_spec = pl.BlockSpec(wblk, lambda n, od, j: (0, 0, j))
        b_spec = pl.BlockSpec(bblk, lambda n, od, j: (0, j))
        o_spec = pl.BlockSpec(oblk, lambda n, od, j: (n * OD + od, 0, j))
    else:
        grid = (n_co, N, OD)
        x_specs = [pl.BlockSpec(xblk, (lambda j, n, od, _k=k:
                                       (n * (D + 2) + 2 * od + _k, 0, 0, 0, 0)))
                   for k in range(3)]
        w_spec = pl.BlockSpec(wblk, lambda j, n, od: (0, 0, j))
        b_spec = pl.BlockSpec(bblk, lambda j, n, od: (0, j))
        o_spec = pl.BlockSpec(oblk, lambda j, n, od: (n * OD + od, 0, j))

    flops = 2 * N * OD * OH * OW * 27 * C * Co
    act_traffic = (1 if j_inner else n_co) * act_bytes
    w_traffic = w_bytes if n_co == 1 else (N * OD * w_bytes if j_inner else w_bytes)
    bytes_accessed = int(act_traffic + w_traffic
                         + N * OD * OH * OWp * Cop * out_isz + Cop * 4)

    out = pl.pallas_call(
        functools.partial(_conv3d_s2_kernel, OH=OH, OWp=OWp, C=C),
        out_shape=jax.ShapeDtypeStruct((N * OD, OH * OWp, Cop), x.dtype),
        grid=grid,
        in_specs=x_specs + [w_spec, b_spec],
        out_specs=o_spec,
        compiler_params=pltpu.CompilerParams(
            dimension_semantics=("parallel", "parallel", "parallel"),
            vmem_limit_bytes=int(0.9 * cap)),
        cost_estimate=pl.CostEstimate(flops=flops, transcendentals=0,
                                      bytes_accessed=bytes_accessed),
    )(xr, xr, xr, w_col, b_col)

    out = out.reshape(N, OD, OH, OWp, Cop)[:, :, :, :OW, :Co]
    return jnp.transpose(out, (0, 4, 1, 2, 3))       # back to NCDHW


@jax.jit
def _avgpool_downsample(x):
    """AvgPool3d(kernel=2, stride=2) on NCDHW input."""
    N, C, D, H, W = x.shape
    OD, OH, OW = D // 2, H // 2, W // 2
    NB = N * OD
    itemsize = jnp.dtype(x.dtype).itemsize

    # TODO(synk): keep activations channels-last across the model -- these two
    # transposes are the bulk of this memory-bound op's HBM traffic.
    xcl = jnp.transpose(x, (0, 2, 3, 4, 1))
    xcl = xcl[:, :2 * OD, :2 * OH, :2 * OW, :]       # AvgPool floor behaviour
    xr = xcl.reshape(NB, 2, OH, 2, OW, 2 * C)

    cap = _vmem_capacity_bytes()
    budget = int(0.6 * cap)

    def _est(tb, toh):
        return 2 * (tb * 2 * toh * 2 * OW * 2 * C * itemsize
                    + tb * toh * OW * C * itemsize)

    TOH = OH
    while TOH > 1 and _est(1, TOH) > budget:
        TOH = -(-TOH // 2)
    TB = 1
    if TOH == OH:
        TB = int(max(1, min(NB, budget // max(1, _est(1, OH)))))

    grid = (pl.cdiv(NB, TB), pl.cdiv(OH, TOH))       # cdiv: no divisor requirement
    # TODO(synk): for very small C the C-wide lane dim leaves most lanes masked;
    # a W*C-fused lane layout would make loads/stores lane-dense.

    out = pl.pallas_call(
        functools.partial(_avgpool2_kernel, C=C),
        out_shape=jax.ShapeDtypeStruct((NB, OH, OW, C), x.dtype),
        grid=grid,
        in_specs=[pl.BlockSpec((TB, 2, TOH, 2, OW, 2 * C),
                               lambda b, t: (b, 0, t, 0, 0, 0))],
        out_specs=pl.BlockSpec((TB, TOH, OW, C), lambda b, t: (b, t, 0, 0)),
        compiler_params=pltpu.CompilerParams(
            dimension_semantics=("parallel", "parallel"),
            vmem_limit_bytes=int(0.9 * cap)),
        cost_estimate=pl.CostEstimate(
            flops=8 * NB * OH * OW * C, transcendentals=0,
            bytes_accessed=int(xr.size * itemsize + NB * OH * OW * C * itemsize)),
    )(xr)

    out = out.reshape(N, OD, OH, OW, C)
    return jnp.transpose(out, (0, 4, 1, 2, 3))       # back to NCDHW


# ------------------------------ module port --------------------------------- #


class DownsampleVolume:
    """Pallas TPU port of lib/models/architecture/volume.py::DownsampleVolume."""

    def __init__(self, channels, use_conv=False, out_channels=None, *, key,
                 compute_dtype=jnp.float32):
        self.channels = channels
        self.out_channels = out_channels or channels
        self.use_conv = use_conv
        self.stride = 2
        self.compute_dtype = compute_dtype
        if use_conv:
            k1, k2 = jax.random.split(key)
            fan_in = channels * 27
            bound = 1.0 / np.sqrt(fan_in)
            # torch Conv3d weight layout: (Cout, Cin, kD, kH, kW); uniform init
            self.weight = jax.random.uniform(
                k1, (self.out_channels, channels, 3, 3, 3), jnp.float32, -bound, bound)
            self.bias = jax.random.uniform(
                k2, (self.out_channels,), jnp.float32, -bound, bound)
        else:
            assert self.channels == self.out_channels
            self.weight = None
            self.bias = None

    def __call__(self, x):
        # x: (N, C, D, H, W)  (PyTorch NCDHW)
        assert x.shape[1] == self.channels
        if self.use_conv:
            return _conv_downsample(x, self.weight, self.bias,
                                    compute_dtype=self.compute_dtype)
        return _avgpool_downsample(x)


# --------------------------------- demo -------------------------------------- #

if __name__ == "__main__":
    key = jax.random.PRNGKey(0)
    kx, kp1, kp2, kx2, kp3 = jax.random.split(key, 5)

    # ---- Path 1: use_conv=False -> AvgPool3d(kernel=2, stride=2) -------------
    N, C, D, H, W = 2, 4, 8, 8, 8
    x = jax.random.normal(kx, (N, C, D, H, W), jnp.float32)
    pool = DownsampleVolume(C, use_conv=False, key=kp1)
    y_pool = jax.block_until_ready(pool(x))
    ref_pool = x.reshape(N, C, D // 2, 2, H // 2, 2, W // 2, 2).mean(axis=(3, 5, 7))
    assert y_pool.shape == (N, C, D // 2, H // 2, W // 2)
    assert jnp.allclose(y_pool, ref_pool, atol=1e-5, rtol=1e-5)

    # ---- Path 2: use_conv=True -> Conv3d(C, 2C, 3, stride=2, padding=1) ------
    # OW=4 -> exercises the OW->OWp pad-and-slice path
    conv = DownsampleVolume(C, use_conv=True, out_channels=2 * C, key=kp2)
    y_conv = jax.block_until_ready(conv(x))
    ref_conv = lax.conv_general_dilated(
        x, conv.weight, window_strides=(2, 2, 2),
        padding=((1, 1), (1, 1), (1, 1)),
        dimension_numbers=("NCDHW", "OIDHW", "NCDHW"),
        precision=lax.Precision.HIGHEST,
    ) + conv.bias.reshape(1, -1, 1, 1, 1)
    assert y_conv.shape == (N, 2 * C, D // 2, H // 2, W // 2)
    assert jnp.allclose(y_conv, ref_conv, atol=1e-3, rtol=1e-3)

    # larger spatial extent (OW=8, already sublane-aligned for f32)
    N2, C2, D2, H2, W2 = 1, 4, 8, 16, 16
    x2 = jax.random.normal(kx2, (N2, C2, D2, H2, W2), jnp.float32)
    conv2 = DownsampleVolume(C2, use_conv=True, out_channels=2 * C2, key=kp3)
    y2 = jax.block_until_ready(conv2(x2))
    ref2 = lax.conv_general_dilated(
        x2, conv2.weight, window_strides=(2, 2, 2),
        padding=((1, 1), (1, 1), (1, 1)),
        dimension_numbers=("NCDHW", "OIDHW", "NCDHW"),
        precision=lax.Precision.HIGHEST,
    ) + conv2.bias.reshape(1, -1, 1, 1, 1)
    assert y2.shape == (N2, 2 * C2, D2 // 2, H2 // 2, W2 // 2)
    assert jnp.allclose(y2, ref2, atol=1e-3, rtol=1e-3)

    # bf16 GEMM operands (f32 accumulate, f32 output) -- the ~2x HBM/MXU lever
    conv2_bf16 = DownsampleVolume(C2, use_conv=True, out_channels=2 * C2, key=kp3,
                                  compute_dtype=jnp.bfloat16)
    y2b = jax.block_until_ready(conv2_bf16(x2))
    rel = jnp.linalg.norm((y2b - ref2).astype(jnp.float32)) / jnp.linalg.norm(ref2)
    assert float(rel) < 5e-2

    print("KERNEL_OK")
</pallas_src>

<mosaic_0001>
module attributes {stable_mosaic.version = 11 : i64} {
  func.func @_avgpool2_kernel(%arg0: i32, %arg1: i32, %arg2: memref<8x2x4x2x4x8xf32, #tpu.memory_space<vmem>>, %arg3: memref<8x4x4x4xf32, #tpu.memory_space<vmem>>) attributes {dimension_semantics = [#tpu.dimension_semantics<parallel>, #tpu.dimension_semantics<parallel>], iteration_bounds = array<i64: 1, 1>, scalar_prefetch = 0 : i64, scratch_operands = 0 : i64, tpu.core_type = #tpu.core_type<tc>, window_params = [{transform_indices = @transform_0, window_bounds = array<i64: 8, 2, 4, 2, 4, 8>}, {transform_indices = @transform_1, window_bounds = array<i64: 8, 4, 4, 4>}]} {
    %c0 = arith.constant 0 : index
    %c0_0 = arith.constant 0 : index
    %c0_1 = arith.constant 0 : index
    %c0_2 = arith.constant 0 : index
    %c0_3 = arith.constant 0 : index
    %c0_4 = arith.constant 0 : index
    %0 = vector.load %arg2[%c0, %c0_0, %c0_1, %c0_2, %c0_3, %c0_4] : memref<8x2x4x2x4x8xf32, #tpu.memory_space<vmem>>, vector<8x2x4x2x4x8xf32>
    %1 = vector.extract_strided_slice %0 {offsets = [0, 0, 0, 0, 0, 0], sizes = [8, 1, 4, 2, 4, 8], strides = [1, 1, 1, 1, 1, 1]} : vector<8x2x4x2x4x8xf32> to vector<8x1x4x2x4x8xf32>
    %2 = vector.shape_cast %1 : vector<8x1x4x2x4x8xf32> to vector<8x4x2x4x8xf32>
    %3 = vector.extract_strided_slice %0 {offsets = [0, 1, 0, 0, 0, 0], sizes = [8, 1, 4, 2, 4, 8], strides = [1, 1, 1, 1, 1, 1]} : vector<8x2x4x2x4x8xf32> to vector<8x1x4x2x4x8xf32>
    %4 = vector.shape_cast %3 : vector<8x1x4x2x4x8xf32> to vector<8x4x2x4x8xf32>
    %5 = arith.addf %2, %4 : vector<8x4x2x4x8xf32>
    %6 = vector.extract_strided_slice %5 {offsets = [0, 0, 0, 0, 0], sizes = [8, 4, 1, 4, 8], strides = [1, 1, 1, 1, 1]} : vector<8x4x2x4x8xf32> to vector<8x4x1x4x8xf32>
    %7 = vector.shape_cast %6 : vector<8x4x1x4x8xf32> to vector<8x4x4x8xf32>
    %8 = vector.extract_strided_slice %5 {offsets = [0, 0, 1, 0, 0], sizes = [8, 4, 1, 4, 8], strides = [1, 1, 1, 1, 1]} : vector<8x4x2x4x8xf32> to vector<8x4x1x4x8xf32>
    %9 = vector.shape_cast %8 : vector<8x4x1x4x8xf32> to vector<8x4x4x8xf32>
    %10 = arith.addf %7, %9 : vector<8x4x4x8xf32>
    %11 = vector.extract_strided_slice %10 {offsets = [0, 0, 0, 0], sizes = [8, 4, 4, 4], strides = [1, 1, 1, 1]} : vector<8x4x4x8xf32> to vector<8x4x4x4xf32>
    %12 = vector.extract_strided_slice %10 {offsets = [0, 0, 0, 4], sizes = [8, 4, 4, 4], strides = [1, 1, 1, 1]} : vector<8x4x4x8xf32> to vector<8x4x4x4xf32>
    %13 = arith.addf %11, %12 : vector<8x4x4x4xf32>
    %cst = arith.constant 1.250000e-01 : f32
    %14 = vector.broadcast %cst : f32 to vector<8x4x4x4xf32>
    %15 = arith.mulf %13, %14 : vector<8x4x4x4xf32>
    %c0_5 = arith.constant 0 : index
    %c0_6 = arith.constant 0 : index
    %c0_7 = arith.constant 0 : index
    %c0_8 = arith.constant 0 : index
    %16 = vector.load %arg3[%c0_5, %c0_6, %c0_7, %c0_8] : memref<8x4x4x4xf32, #tpu.memory_space<vmem>>, vector<8x4x4x4xf32>
    tpu.vector_store %arg3[%c0_5, %c0_6, %c0_7, %c0_8], %15 {strides = array<i32>} : memref<8x4x4x4xf32, #tpu.memory_space<vmem>>, vector<8x4x4x4xf32>,
    return
  }
  func.func @transform_0(%arg0: i32, %arg1: i32) -> (i32, i32, i32, i32, i32, i32) {
    %c0_i32 = arith.constant 0 : i32
    %c0_i32_0 = arith.constant 0 : i32
    %c0_i32_1 = arith.constant 0 : i32
    %c0_i32_2 = arith.constant 0 : i32
    %c0_i32_3 = arith.constant 0 : i32
    return %arg0, %c0_i32, %arg1, %c0_i32_0, %c0_i32_1, %c0_i32_2 : i32, i32, i32, i32, i32, i32
  }
  func.func @transform_1(%arg0: i32, %arg1: i32) -> (i32, i32, i32, i32) {
    %c0_i32 = arith.constant 0 : i32
    %c0_i32_0 = arith.constant 0 : i32
    %c0_i32_1 = arith.constant 0 : i32
    return %arg0, %arg1, %c0_i32, %c0_i32_0 : i32, i32, i32, i32
  }
}

</mosaic_0001>

<llo_original>
// kernel: _avgpool_downsample.1
$region0: #{_avgpool_downsample.1}
  #allocation0 [shape = 'u32[]', space=smem, size = 0x4, offset = 0x4, fixed_abs, tag = 'smem constant byte address 0x4 - core index']
  #allocation1 [shape = 'u32[144,128]{1,0:T(1,128)}', space=vmem, size = 0x12000, scoped, tag = 'internal scratch']
  %s0 = inlined_call_operand.vmem [shape: f32[8,2,4,2,4,8], index: 0, kind: input, shape index: {}]
  %s1 = inlined_call_operand.vmem [shape: f32[8,4,4,4], index: 1, kind: output, shape index: {}]
  %s2 = sld [smem:[#allocation0]]
  $region14: #{_avgpool_downsample.1} parent=0
    _
  %s4 = ssub.s32 1, %s2
  %s5 = scalar_select 0, %s4, %s2
  // Predicated region
  $region2: #{_avgpool_downsample.1} parent=0 // pred_check
    _
  $region3: #{_avgpool_downsample.1} parent=0 // pred_check_branch
    %7 = sbr.rel (0) target = $region5
  $region4: #{_avgpool_downsample.1} parent=0 // pred_region
    _
  $region5: #{_avgpool_downsample.1} parent=0 // pred_fallthru
    _
  %v8 = vld [vmem:[%s0] sm:$0xf]
  %v9 = vld [vmem:[%s0 + $0x4] sm:$0xf]
  %v10 = vld [vmem:[%s0 + $0x8] sm:$0xf]
  %v11 = vld [vmem:[%s0 + $0xc] sm:$0xf]
  %v12 = vld [vmem:[%s0 + $0x10] sm:$0xf]
  %v13 = vld [vmem:[%s0 + $0x14] sm:$0xf]
  %v14 = vld [vmem:[%s0 + $0x18] sm:$0xf]
  %v15 = vld [vmem:[%s0 + $0x1c] sm:$0xf]
  %v16 = vld [vmem:[%s0 + $0x20] sm:$0xf]
  %v17 = vld [vmem:[%s0 + $0x24] sm:$0xf]
  %v18 = vld [vmem:[%s0 + $0x28] sm:$0xf]
  %v19 = vld [vmem:[%s0 + $0x2c] sm:$0xf]
  %v20 = vld [vmem:[%s0 + $0x30] sm:$0xf]
  %v21 = vld [vmem:[%s0 + $0x34] sm:$0xf]
  %v22 = vld [vmem:[%s0 + $0x38] sm:$0xf]
  %v23 = vld [vmem:[%s0 + $0x3c] sm:$0xf]
  %v24 = vld [vmem:[%s0 + $0x40] sm:$0xf]
  %v25 = vld [vmem:[%s0 + $0x44] sm:$0xf]
  %v26 = vld [vmem:[%s0 + $0x48] sm:$0xf]
  %v27 = vld [vmem:[%s0 + $0x4c] sm:$0xf]
  %v28 = vld [vmem:[%s0 + $0x50] sm:$0xf]
  %v29 = vld [vmem:[%s0 + $0x54] sm:$0xf]
  %v30 = vld [vmem:[%s0 + $0x58] sm:$0xf]
  %v31 = vld [vmem:[%s0 + $0x5c] sm:$0xf]
  %v32 = vld [vmem:[%s0 + $0x60] sm:$0xf]
  %v33 = vld [vmem:[%s0 + $0x64] sm:$0xf]
  %v34 = vld [vmem:[%s0 + $0x68] sm:$0xf]
  %v35 = vld [vmem:[%s0 + $0x6c] sm:$0xf]
  %v36 = vld [vmem:[%s0 + $0x70] sm:$0xf]
  %v37 = vld [vmem:[%s0 + $0x74] sm:$0xf]
  %v38 = vld [vmem:[%s0 + $0x78] sm:$0xf]
  %v39 = vld [vmem:[%s0 + $0x7c] sm:$0xf]
  %v40 = vld [vmem:[%s0 + $0x80] sm:$0xf]
  %v41 = vld [vmem:[%s0 + $0x84] sm:$0xf]
  %v42 = vld [vmem:[%s0 + $0x88] sm:$0xf]
  %v43 = vld [vmem:[%s0 + $0x8c] sm:$0xf]
  %v44 = vld [vmem:[%s0 + $0x90] sm:$0xf]
  %v45 = vld [vmem:[%s0 + $0x94] sm:$0xf]
  %v46 = vld [vmem:[%s0 + $0x98] sm:$0xf]
  %v47 = vld [vmem:[%s0 + $0x9c] sm:$0xf]
  %v48 = vld [vmem:[%s0 + $0xa0] sm:$0xf]
  %v49 = vld [vmem:[%s0 + $0xa4] sm:$0xf]
  %v50 = vld [vmem:[%s0 + $0xa8] sm:$0xf]
  %v51 = vld [vmem:[%s0 + $0xac] sm:$0xf]
  %v52 = vld [vmem:[%s0 + $0xb0] sm:$0xf]
  %v53 = vld [vmem:[%s0 + $0xb4] sm:$0xf]
  %v54 = vld [vmem:[%s0 + $0xb8] sm:$0xf]
  %v55 = vld [vmem:[%s0 + $0xbc] sm:$0xf]
  %v56 = vld [vmem:[%s0 + $0xc0] sm:$0xf]
  %v57 = vld [vmem:[%s0 + $0xc4] sm:$0xf]
  %v58 = vld [vmem:[%s0 + $0xc8] sm:$0xf]
  %v59 = vld [vmem:[%s0 + $0xcc] sm:$0xf]
  %v60 = vld [vmem:[%s0 + $0xd0] sm:$0xf]
  %v61 = vld [vmem:[%s0 + $0xd4] sm:$0xf]
  %v62 = vld [vmem:[%s0 + $0xd8] sm:$0xf]
  %v63 = vld [vmem:[%s0 + $0xdc] sm:$0xf]
  %v64 = vld [vmem:[%s0 + $0xe0] sm:$0xf]
  %v65 = vld [vmem:[%s0 + $0xe4] sm:$0xf]
  %v66 = vld [vmem:[%s0 + $0xe8] sm:$0xf]
  %v67 = vld [vmem:[%s0 + $0xec] sm:$0xf]
  %v68 = vld [vmem:[%s0 + $0xf0] sm:$0xf]
  %v69 = vld [vmem:[%s0 + $0xf4] sm:$0xf]
  %v70 = vld [vmem:[%s0 + $0xf8] sm:$0xf]
  %v71 = vld [vmem:[%s0 + $0xfc] sm:$0xf]
  %v72 = vld [vmem:[%s0 + $0x100] sm:$0xf]
  %v73 = vld [vmem:[%s0 + $0x104] sm:$0xf]
  %v74 = vld [vmem:[%s0 + $0x108] sm:$0xf]
  %v75 = vld [vmem:[%s0 + $0x10c] sm:$0xf]
  %v76 = vld [vmem:[%s0 + $0x110] sm:$0xf]
  %v77 = vld [vmem:[%s0 + $0x114] sm:$0xf]
  %v78 = vld [vmem:[%s0 + $0x118] sm:$0xf]
  %v79 = vld [vmem:[%s0 + $0x11c] sm:$0xf]
  %v80 = vld [vmem:[%s0 + $0x120] sm:$0xf]
  %v81 = vld [vmem:[%s0 + $0x124] sm:$0xf]
  %v82 = vld [vmem:[%s0 + $0x128] sm:$0xf]
  %v83 = vld [vmem:[%s0 + $0x12c] sm:$0xf]
  %v84 = vld [vmem:[%s0 + $0x130] sm:$0xf]
  %v85 = vld [vmem:[%s0 + $0x134] sm:$0xf]
  %v86 = vld [vmem:[%s0 + $0x138] sm:$0xf]
  %v87 = vld [vmem:[%s0 + $0x13c] sm:$0xf]
  %v88 = vld [vmem:[%s0 + $0x140] sm:$0xf]
  %v89 = vld [vmem:[%s0 + $0x144] sm:$0xf]
  %v90 = vld [vmem:[%s0 + $0x148] sm:$0xf]
  %v91 = vld [vmem:[%s0 + $0x14c] sm:$0xf]
  %v92 = vld [vmem:[%s0 + $0x150] sm:$0xf]
  %v93 = vld [vmem:[%s0 + $0x154] sm:$0xf]
  %v94 = vld [vmem:[%s0 + $0x158] sm:$0xf]
  %v95 = vld [vmem:[%s0 + $0x15c] sm:$0xf]
  %v96 = vld [vmem:[%s0 + $0x160] sm:$0xf]
  %v97 = vld [vmem:[%s0 + $0x164] sm:$0xf]
  %v98 = vld [vmem:[%s0 + $0x168] sm:$0xf]
  %v99 = vld [vmem:[%s0 + $0x16c] sm:$0xf]
  %v100 = vld [vmem:[%s0 + $0x170] sm:$0xf]
  %v101 = vld [vmem:[%s0 + $0x174] sm:$0xf]
  %v102 = vld [vmem:[%s0 + $0x178] sm:$0xf]
  %v103 = vld [vmem:[%s0 + $0x17c] sm:$0xf]
  %v104 = vld [vmem:[%s0 + $0x180] sm:$0xf]
  %v105 = vld [vmem:[%s0 + $0x184] sm:$0xf]
  %v106 = vld [vmem:[%s0 + $0x188] sm:$0xf]
  %v107 = vld [vmem:[%s0 + $0x18c] sm:$0xf]
  %v108 = vld [vmem:[%s0 + $0x190] sm:$0xf]
  %v109 = vld [vmem:[%s0 + $0x194] sm:$0xf]
  %v110 = vld [vmem:[%s0 + $0x198] sm:$0xf]
  %v111 = vld [vmem:[%s0 + $0x19c] sm:$0xf]
  %v112 = vld [vmem:[%s0 + $0x1a0] sm:$0xf]
  %v113 = vld [vmem:[%s0 + $0x1a4] sm:$0xf]
  %v114 = vld [vmem:[%s0 + $0x1a8] sm:$0xf]
  %v115 = vld [vmem:[%s0 + $0x1ac] sm:$0xf]
  %v116 = vld [vmem:[%s0 + $0x1b0] sm:$0xf]
  %v117 = vld [vmem:[%s0 + $0x1b4] sm:$0xf]
  %v118 = vld [vmem:[%s0 + $0x1b8] sm:$0xf]
  %v119 = vld [vmem:[%s0 + $0x1bc] sm:$0xf]
  %v120 = vld [vmem:[%s0 + $0x1c0] sm:$0xf]
  %v121 = vld [vmem:[%s0 + $0x1c4] sm:$0xf]
  %v122 = vld [vmem:[%s0 + $0x1c8] sm:$0xf]
  %v123 = vld [vmem:[%s0 + $0x1cc] sm:$0xf]
  %v124 = vld [vmem:[%s0 + $0x1d0] sm:$0xf]
  %v125 = vld [vmem:[%s0 + $0x1d4] sm:$0xf]
  %v126 = vld [vmem:[%s0 + $0x1d8] sm:$0xf]
  %v127 = vld [vmem:[%s0 + $0x1dc] sm:$0xf]
  %v128 = vld [vmem:[%s0 + $0x1e0] sm:$0xf]
  %v129 = vld [vmem:[%s0 + $0x1e4] sm:$0xf]
  %v130 = vld [vmem:[%s0 + $0x1e8] sm:$0xf]
  %v131 = vld [vmem:[%s0 + $0x1ec] sm:$0xf]
  %v132 = vld [vmem:[%s0 + $0x1f0] sm:$0xf]
  %v133 = vld [vmem:[%s0 + $0x1f4] sm:$0xf]
  %v134 = vld [vmem:[%s0 + $0x1f8] sm:$0xf]
  %v135 = vld [vmem:[%s0 + $0x1fc] sm:$0xf]
  %v136 = vadd.f32 %v8, %v16
  %v137 = vadd.f32 %v9, %v17
  %v138 = vadd.f32 %v10, %v18
  %v139 = vadd.f32 %v11, %v19
  %v140 = vadd.f32 %v12, %v20
  %v141 = vadd.f32 %v13, %v21
  %v142 = vadd.f32 %v14, %v22
  %v143 = vadd.f32 %v15, %v23
  %v144 = vadd.f32 %v24, %v32
  %v145 = vadd.f32 %v25, %v33
  %v146 = vadd.f32 %v26, %v34
  %v147 = vadd.f32 %v27, %v35
  %v148 = vadd.f32 %v28, %v36
  %v149 = vadd.f32 %v29, %v37
  %v150 = vadd.f32 %v30, %v38
  %v151 = vadd.f32 %v31, %v39
  %v152 = vadd.f32 %v40, %v48
  %v153 = vadd.f32 %v41, %v49
  %v154 = vadd.f32 %v42, %v50
  %v155 = vadd.f32 %v43, %v51
  %v156 = vadd.f32 %v44, %v52
  %v157 = vadd.f32 %v45, %v53
  %v158 = vadd.f32 %v46, %v54
  %v159 = vadd.f32 %v47, %v55
  %v160 = vadd.f32 %v56, %v64
  %v161 = vadd.f32 %v57, %v65
  %v162 = vadd.f32 %v58, %v66
  %v163 = vadd.f32 %v59, %v67
  %v164 = vadd.f32 %v60, %v68
  %v165 = vadd.f32 %v61, %v69
  %v166 = vadd.f32 %v62, %v70
  %v167 = vadd.f32 %v63, %v71
  %v168 = vadd.f32 %v72, %v80
  %v169 = vadd.f32 %v73, %v81
  %v170 = vadd.f32 %v74, %v82
  %v171 = vadd.f32 %v75, %v83
  %v172 = vadd.f32 %v76, %v84
  %v173 = vadd.f32 %v77, %v85
  %v174 = vadd.f32 %v78, %v86
  %v175 = vadd.f32 %v79, %v87
  %v176 = vadd.f32 %v88, %v96
  %v177 = vadd.f32 %v89, %v97
  %v178 = vadd.f32 %v90, %v98
  %v179 = vadd.f32 %v91, %v99
  %v180 = vadd.f32 %v92, %v100
  %v181 = vadd.f32 %v93, %v101
  %v182 = vadd.f32 %v94, %v102
  %v183 = vadd.f32 %v95, %v103
  %v184 = vadd.f32 %v104, %v112
  %v185 = vadd.f32 %v105, %v113
  %v186 = vadd.f32 %v106, %v114
  %v187 = vadd.f32 %v107, %v115
  %v188 = vadd.f32 %v108, %v116
  %v189 = vadd.f32 %v109, %v117
  %v190 = vadd.f32 %v110, %v118
  %v191 = vadd.f32 %v111, %v119
  %v192 = vadd.f32 %v120, %v128
  %v193 = vadd.f32 %v121, %v129
  %v194 = vadd.f32 %v122, %v130
  %v195 = vadd.f32 %v123, %v131
  %v196 = vadd.f32 %v124, %v132
  %v197 = vadd.f32 %v125, %v133
  %v198 = vadd.f32 %v126, %v134
  %v199 = vadd.f32 %v127, %v135
  %v200 = vadd.f32 %v136, %v137
  %v201 = vadd.f32 %v138, %v139
  %v202 = vadd.f32 %v140, %v141
  %v203 = vadd.f32 %v142, %v143
  %v204 = vadd.f32 %v144, %v145
  %v205 = vadd.f32 %v146, %v147
  %v206 = vadd.f32 %v148, %v149
  %v207 = vadd.f32 %v150, %v151
  %v208 = vadd.f32 %v152, %v153
  %v209 = vadd.f32 %v154, %v155
  %v210 = vadd.f32 %v156, %v157
  %v211 = vadd.f32 %v158, %v159
  %v212 = vadd.f32 %v160, %v161
  %v213 = vadd.f32 %v162, %v163
  %v214 = vadd.f32 %v164, %v165
  %v215 = vadd.f32 %v166, %v167
  %v216 = vadd.f32 %v168, %v169
  %v217 = vadd.f32 %v170, %v171
  %v218 = vadd.f32 %v172, %v173
  %v219 = vadd.f32 %v174, %v175
  %v220 = vadd.f32 %v176, %v177
  %v221 = vadd.f32 %v178, %v179
  %v222 = vadd.f32 %v180, %v181
  %v223 = vadd.f32 %v182, %v183
  %v224 = vadd.f32 %v184, %v185
  %v225 = vadd.f32 %v186, %v187
  %v226 = vadd.f32 %v188, %v189
  %v227 = vadd.f32 %v190, %v191
  %v228 = vadd.f32 %v192, %v193
  %v229 = vadd.f32 %v194, %v195
  %v230 = vadd.f32 %v196, %v197
  %v231 = vadd.f32 %v198, %v199
  %264 = vrot.lane.b32.xlu0 %v200, 124
  %v265 = vpop.permute.xlu0 %264
  %266 = vrot.lane.b32.xlu0 %v201, 124
  %v267 = vpop.permute.xlu0 %266
  %268 = vrot.lane.b32.xlu0 %v202, 124
  %v269 = vpop.permute.xlu0 %268
  %270 = vrot.lane.b32.xlu0 %v203, 124
  %v271 = vpop.permute.xlu0 %270
  %272 = vrot.lane.b32.xlu0 %v204, 124
  %v273 = vpop.permute.xlu0 %272
  %274 = vrot.lane.b32.xlu0 %v205, 124
  %v275 = vpop.permute.xlu0 %274
  %276 = vrot.lane.b32.xlu0 %v206, 124
  %v277 = vpop.permute.xlu0 %276
  %278 = vrot.lane.b32.xlu0 %v207, 124
  %v279 = vpop.permute.xlu0 %278
  %280 = vrot.lane.b32.xlu0 %v208, 124
  %v281 = vpop.permute.xlu0 %280
  %282 = vrot.lane.b32.xlu0 %v209, 124
  %v283 = vpop.permute.xlu0 %282
  %284 = vrot.lane.b32.xlu0 %v210, 124
  %v285 = vpop.permute.xlu0 %284
  %286 = vrot.lane.b32.xlu0 %v211, 124
  %v287 = vpop.permute.xlu0 %286
  %288 = vrot.lane.b32.xlu0 %v212, 124
  %v289 = vpop.permute.xlu0 %288
  %290 = vrot.lane.b32.xlu0 %v213, 124
  %v291 = vpop.permute.xlu0 %290
  %292 = vrot.lane.b32.xlu0 %v214, 124
  %v293 = vpop.permute.xlu0 %292
  %294 = vrot.lane.b32.xlu0 %v215, 124
  %v295 = vpop.permute.xlu0 %294
  %296 = vrot.lane.b32.xlu0 %v216, 124
  %v297 = vpop.permute.xlu0 %296
  %298 = vrot.lane.b32.xlu0 %v217, 124
  %v299 = vpop.permute.xlu0 %298
  %300 = vrot.lane.b32.xlu0 %v218, 124
  %v301 = vpop.permute.xlu0 %300
  %302 = vrot.lane.b32.xlu0 %v219, 124
  %v303 = vpop.permute.xlu0 %302
  %304 = vrot.lane.b32.xlu0 %v220, 124
  %v305 = vpop.permute.xlu0 %304
  %306 = vrot.lane.b32.xlu0 %v221, 124
  %v307 = vpop.permute.xlu0 %306
  %308 = vrot.lane.b32.xlu0 %v222, 124
  %v309 = vpop.permute.xlu0 %308
  %310 = vrot.lane.b32.xlu0 %v223, 124
  %v311 = vpop.permute.xlu0 %310
  %312 = vrot.lane.b32.xlu0 %v224, 124
  %v313 = vpop.permute.xlu0 %312
  %314 = vrot.lane.b32.xlu0 %v225, 124
  %v315 = vpop.permute.xlu0 %314
  %316 = vrot.lane.b32.xlu0 %v226, 124
  %v317 = vpop.permute.xlu0 %316
  %318 = vrot.lane.b32.xlu0 %v227, 124
  %v319 = vpop.permute.xlu0 %318
  %320 = vrot.lane.b32.xlu0 %v228, 124
  %v321 = vpop.permute.xlu0 %320
  %322 = vrot.lane.b32.xlu0 %v229, 124
  %v323 = vpop.permute.xlu0 %322
  %324 = vrot.lane.b32.xlu0 %v230, 124
  %v325 = vpop.permute.xlu0 %324
  %326 = vrot.lane.b32.xlu0 %v231, 124
  %v327 = vpop.permute.xlu0 %326
  %v360 = vadd.f32 %v200, %v265
  %v361 = vadd.f32 %v201, %v267
  %v362 = vadd.f32 %v202, %v269
  %v363 = vadd.f32 %v203, %v271
  %v364 = vadd.f32 %v204, %v273
  %v365 = vadd.f32 %v205, %v275
  %v366 = vadd.f32 %v206, %v277
  %v367 = vadd.f32 %v207, %v279
  %v368 = vadd.f32 %v208, %v281
  %v369 = vadd.f32 %v209, %v283
  %v370 = vadd.f32 %v210, %v285
  %v371 = vadd.f32 %v211, %v287
  %v372 = vadd.f32 %v212, %v289
  %v373 = vadd.f32 %v213, %v291
  %v374 = vadd.f32 %v214, %v293
  %v375 = vadd.f32 %v215, %v295
  %v376 = vadd.f32 %v216, %v297
  %v377 = vadd.f32 %v217, %v299
  %v378 = vadd.f32 %v218, %v301
  %v379 = vadd.f32 %v219, %v303
  %v380 = vadd.f32 %v220, %v305
  %v381 = vadd.f32 %v221, %v307
  %v382 = vadd.f32 %v222, %v309
  %v383 = vadd.f32 %v223, %v311
  %v384 = vadd.f32 %v224, %v313
  %v385 = vadd.f32 %v225, %v315
  %v386 = vadd.f32 %v226, %v317
  %v387 = vadd.f32 %v227, %v319
  %v388 = vadd.f32 %v228, %v321
  %v389 = vadd.f32 %v229, %v323
  %v390 = vadd.f32 %v230, %v325
  %v391 = vadd.f32 %v231, %v327
  %v392 = vmul.f32 %v360, 0.125
  %v393 = vmul.f32 %v361, 0.125
  %v394 = vmul.f32 %v362, 0.125
  %v395 = vmul.f32 %v363, 0.125
  %v396 = vmul.f32 %v364, 0.125
  %v397 = vmul.f32 %v365, 0.125
  %v398 = vmul.f32 %v366, 0.125
  %v399 = vmul.f32 %v367, 0.125
  %v400 = vmul.f32 %v368, 0.125
  %v401 = vmul.f32 %v369, 0.125
  %v402 = vmul.f32 %v370, 0.125
  %v403 = vmul.f32 %v371, 0.125
  %v404 = vmul.f32 %v372, 0.125
  %v405 = vmul.f32 %v373, 0.125
  %v406 = vmul.f32 %v374, 0.125
  %v407 = vmul.f32 %v375, 0.125
  %v408 = vmul.f32 %v376, 0.125
  %v409 = vmul.f32 %v377, 0.125
  %v410 = vmul.f32 %v378, 0.125
  %v411 = vmul.f32 %v379, 0.125
  %v412 = vmul.f32 %v380, 0.125
  %v413 = vmul.f32 %v381, 0.125
  %v414 = vmul.f32 %v382, 0.125
  %v415 = vmul.f32 %v383, 0.125
  %v416 = vmul.f32 %v384, 0.125
  %v417 = vmul.f32 %v385, 0.125
  %v418 = vmul.f32 %v386, 0.125
  %v419 = vmul.f32 %v387, 0.125
  %v420 = vmul.f32 %v388, 0.125
  %v421 = vmul.f32 %v389, 0.125
  %v422 = vmul.f32 %v390, 0.125
  %v423 = vmul.f32 %v391, 0.125
  %vm424 = vcmask 27648
  %425 = vst.msk [vmem:[%s1] sm:$0xf] %vm424, %v392
  %426 = vst.msk [vmem:[%s1 + $0x4] sm:$0xf] %vm424, %v393
  %427 = vst.msk [vmem:[%s1 + $0x8] sm:$0xf] %vm424, %v394
  %428 = vst.msk [vmem:[%s1 + $0xc] sm:$0xf] %vm424, %v395
  %429 = vst.msk [vmem:[%s1 + $0x10] sm:$0xf] %vm424, %v396
  %430 = vst.msk [vmem:[%s1 + $0x14] sm:$0xf] %vm424, %v397
  %431 = vst.msk [vmem:[%s1 + $0x18] sm:$0xf] %vm424, %v398
  %432 = vst.msk [vmem:[%s1 + $0x1c] sm:$0xf] %vm424, %v399
  %433 = vst.msk [vmem:[%s1 + $0x20] sm:$0xf] %vm424, %v400
  %434 = vst.msk [vmem:[%s1 + $0x24] sm:$0xf] %vm424, %v401
  %435 = vst.msk [vmem:[%s1 + $0x28] sm:$0xf] %vm424, %v402
  %436 = vst.msk [vmem:[%s1 + $0x2c] sm:$0xf] %vm424, %v403
  %437 = vst.msk [vmem:[%s1 + $0x30] sm:$0xf] %vm424, %v404
  %438 = vst.msk [vmem:[%s1 + $0x34] sm:$0xf] %vm424, %v405
  %439 = vst.msk [vmem:[%s1 + $0x38] sm:$0xf] %vm424, %v406
  %440 = vst.msk [vmem:[%s1 + $0x3c] sm:$0xf] %vm424, %v407
  %441 = vst.msk [vmem:[%s1 + $0x40] sm:$0xf] %vm424, %v408
  %442 = vst.msk [vmem:[%s1 + $0x44] sm:$0xf] %vm424, %v409
  %443 = vst.msk [vmem:[%s1 + $0x48] sm:$0xf] %vm424, %v410
  %444 = vst.msk [vmem:[%s1 + $0x4c] sm:$0xf] %vm424, %v411
  %445 = vst.msk [vmem:[%s1 + $0x50] sm:$0xf] %vm424, %v412
  %446 = vst.msk [vmem:[%s1 + $0x54] sm:$0xf] %vm424, %v413
  %447 = vst.msk [vmem:[%s1 + $0x58] sm:$0xf] %vm424, %v414
  %448 = vst.msk [vmem:[%s1 + $0x5c] sm:$0xf] %vm424, %v415
  %449 = vst.msk [vmem:[%s1 + $0x60] sm:$0xf] %vm424, %v416
  %450 = vst.msk [vmem:[%s1 + $0x64] sm:$0xf] %vm424, %v417
  %451 = vst.msk [vmem:[%s1 + $0x68] sm:$0xf] %vm424, %v418
  %452 = vst.msk [vmem:[%s1 + $0x6c] sm:$0xf] %vm424, %v419
  %453 = vst.msk [vmem:[%s1 + $0x70] sm:$0xf] %vm424, %v420
  %454 = vst.msk [vmem:[%s1 + $0x74] sm:$0xf] %vm424, %v421
  %455 = vst.msk [vmem:[%s1 + $0x78] sm:$0xf] %vm424, %v422
  %456 = vst.msk [vmem:[%s1 + $0x7c] sm:$0xf] %vm424, %v423
  // Predicated region
  $region6: #{_avgpool_downsample.1} parent=0 // pred_check
    _
  $region7: #{_avgpool_downsample.1} parent=0 // pred_check_branch
    %458 = sbr.rel (0) target = $region9
  $region8: #{_avgpool_downsample.1} parent=0 // pred_region
    _
  $region9: #{_avgpool_downsample.1} parent=0 // pred_fallthru
    _
  // Predicated region
  $region10: #{_avgpool_downsample.1} parent=0 // pred_check
    _
  $region11: #{_avgpool_downsample.1} parent=0 // pred_check_branch
    %460 = sbr.rel (0) target = $region13
  $region12: #{_avgpool_downsample.1} parent=0 // pred_region
    _
  $region13: #{_avgpool_downsample.1} parent=0 // pred_fallthru
    _

</llo_original>
